<compile_context>
chip_gen: v5e
topology: v5e:2x2
jax: 0.10.0
libtpu: 0.0.40
codegen_flags: <defaults>
</compile_context>

<pallas_src>
import math
from functools import partial

import jax
import jax.numpy as jnp
from jax.experimental import pallas as pl
from jax.experimental.pallas import tpu as pltpu


# ------------------------------- Pallas kernel -------------------------------

def _patch_embed_kernel(p_ref, w_ref, s_ref, o_ref, *, eps, cout):
    # Fused: (patches @ w + b) followed by LayerNorm over the channel axis.
    # p_ref: (tm, K) bf16, w_ref: (K, Cout) bf16 (resident),
    # s_ref: (3, Cout) f32 packed [bias; ln_gamma; ln_beta].
    acc = jnp.dot(p_ref[...], w_ref[...],
                  preferred_element_type=jnp.float32)            # (tm, Cout) f32
    sp = s_ref[...]                                              # (3, Cout)
    acc = acc + sp[0:1, :]

    # One-pass LN statistics: the two reductions are independent (can use
    # both XLU units) instead of mean followed by a dependent mean((x-m)^2).
    s1 = jnp.sum(acc, axis=-1, keepdims=True)
    s2 = jnp.sum(acc * acc, axis=-1, keepdims=True)
    inv_c = jnp.float32(1.0 / cout)
    mean = s1 * inv_c
    var = s2 * inv_c - mean * mean
    xhat = (acc - mean) * jax.lax.rsqrt(var + eps)
    o_ref[...] = (xhat * sp[1:2, :] + sp[2:3, :]).astype(o_ref.dtype)


# --------------------------------- helpers ------------------------------------

def _round_up(x, m):
    return (x + m - 1) // m * m


def _choose_tm(M, K, Cout, budget_bytes=24 << 20):
    """Pick the row-tile size (multiple of 16 for bf16 sublane packing)."""
    # Per-row VMEM cost: double-buffered bf16 patches tile + double-buffered
    # f32 output tile (both lane-padded).
    per_row = 2 * _round_up(K, 128) * 2 + 2 * _round_up(Cout, 128) * 4
    tm = min(2048, max(16, (budget_bytes // per_row) // 16 * 16))
    tm = min(tm, _round_up(M, 16))
    # Keep at least 2 grid steps when M allows it (feeds both TCs on v7x).
    if M > 16 and pl.cdiv(M, tm) < 2:
        tm = max(16, _round_up(pl.cdiv(M, 2), 16))
    return tm


# ------------------------------ forward wrapper -------------------------------

def overlap_patch_embed(params, x, *, patch_size, stride, eps=1e-5):
    """x: (B, Cin, H, W) float32 -> (tokens (B, N, embed_dim), H_out, W_out)."""
    assert eps > 0.0  # padded (all-zero) rows rely on eps>0 for finite rsqrt
    B, Cin, H, W = x.shape
    kh = kw = patch_size
    pad = patch_size // 2

    w_kc = params["proj_w_kc"]                      # (K, Cout) bf16, from init
    K, Cout = w_kc.shape
    assert K == Cin * kh * kw

    H_out = (H + 2 * pad - kh) // stride + 1
    W_out = (W + 2 * pad - kw) // stride + 1
    M = B * H_out * W_out

    # im2col in the wrapper (bf16 halves the HBM traffic of the inflated
    # patches array); kh*kw static strided slices -> conv == one matmul.
    # TODO(synk): feedback 2b -- build the patch matrix on-chip from raw x rows
    # (halo DMA) to remove this HBM materialization entirely.
    x_pad = jnp.pad(x, ((0, 0), (0, 0), (pad, pad), (pad, pad))).astype(jnp.bfloat16)
    cols = []
    for ki in range(kh):
        for kj in range(kw):
            cols.append(
                x_pad[:, :,
                      ki: ki + stride * (H_out - 1) + 1: stride,
                      kj: kj + stride * (W_out - 1) + 1: stride])   # (B,Cin,Ho,Wo)
    patches = jnp.stack(cols, axis=-1)                 # (B, Cin, Ho, Wo, kh*kw)
    patches = patches.transpose(0, 2, 3, 1, 4)         # (B, Ho, Wo, Cin, kh*kw)
    patches = patches.reshape(M, K)                    # K order: (cin, ki, kj)

    # Pack bias / gamma / beta into a single small operand (one DMA stream).
    packed = jnp.stack(
        [params["proj_b"], params["ln_g"], params["ln_b"]], axis=0
    ).astype(jnp.float32)                              # (3, Cout)

    # Row tiling: large VMEM-budgeted tiles, >=2 grid steps when possible.
    tm = _choose_tm(M, K, Cout)
    M_pad = _round_up(M, tm)
    if M_pad != M:
        patches = jnp.pad(patches, ((0, M_pad - M), (0, 0)))

    # Explicit scoped-VMEM limit covering double-buffered tiles + resident weight.
    K_l = _round_up(K, 128)
    C_l = _round_up(Cout, 128)
    vmem_need = (2 * tm * K_l * 2          # patches tile, bf16, double-buffered
                 + 2 * tm * C_l * 4        # output tile, f32, double-buffered
                 + 2 * K_l * C_l * 2       # weight, bf16
                 + 2 * 8 * C_l * 4)        # packed bias/gamma/beta
    vmem_limit = int(min(56 << 20, max(16 << 20, 2 * vmem_need)))

    cost = pl.CostEstimate(
        flops=2 * M_pad * K * Cout,
        transcendentals=M_pad,
        bytes_accessed=(patches.size * 2 + w_kc.size * 2
                        + packed.size * 4 + M_pad * Cout * 4))

    out = pl.pallas_call(
        partial(_patch_embed_kernel, eps=eps, cout=Cout),
        out_shape=jax.ShapeDtypeStruct((M_pad, Cout), jnp.float32),
        grid=(M_pad // tm,),
        in_specs=[
            pl.BlockSpec((tm, K), lambda i: (i, 0)),      # patches tile (bf16)
            pl.BlockSpec((K, Cout), lambda i: (0, 0)),    # weight (resident)
            pl.BlockSpec((3, Cout), lambda i: (0, 0)),    # bias/gamma/beta
        ],
        out_specs=pl.BlockSpec((tm, Cout), lambda i: (i, 0)),
        compiler_params=pltpu.CompilerParams(
            dimension_semantics=("parallel",),
            vmem_limit_bytes=vmem_limit,
            allow_input_fusion=[True, False, False]),
        cost_estimate=cost,
    )(patches, w_kc, packed)

    tokens = out[:M].reshape(B, H_out * W_out, Cout)
    return tokens, H_out, W_out


# --------------------------- parameter initialization -------------------------

def init_overlap_patch_embed_params(key, in_chans, embed_dim, patch_size):
    # Matches PyTorch _init_weights: conv ~ N(0, sqrt(2/fan_out)), bias 0,
    # LayerNorm weight 1, bias 0.
    fan_out = patch_size * patch_size * embed_dim
    std = math.sqrt(2.0 / fan_out)
    proj_w = jax.random.normal(
        key, (embed_dim, in_chans, patch_size, patch_size), jnp.float32) * std
    # Pre-transpose + pre-cast ONCE here: (Cout, Cin, kh, kw) -> (K, Cout) bf16.
    # K flattening order (cin, ki, kj) matches the im2col gather order above.
    proj_w_kc = proj_w.reshape(embed_dim, -1).T.astype(jnp.bfloat16)
    return {
        "proj_w": proj_w,            # OIHW f32 (reference / checkpoint format)
        "proj_w_kc": proj_w_kc,      # (K, Cout) bf16 (kernel operand)
        "proj_b": jnp.zeros((embed_dim,), jnp.float32),
        "ln_g": jnp.ones((embed_dim,), jnp.float32),
        "ln_b": jnp.zeros((embed_dim,), jnp.float32),
    }


# ------------------------------ reference (jnp) -------------------------------

def overlap_patch_embed_ref(params, x, *, patch_size, stride):
    pad = patch_size // 2
    y = jax.lax.conv_general_dilated(
        x, params["proj_w"], (stride, stride),
        [(pad, pad), (pad, pad)],
        dimension_numbers=("NCHW", "OIHW", "NCHW"),
        precision=jax.lax.Precision.HIGHEST)
    y = y + params["proj_b"][None, :, None, None]
    B, C, Ho, Wo = y.shape
    y = y.reshape(B, C, Ho * Wo).transpose(0, 2, 1)       # (B, N, C)
    mean = jnp.mean(y, -1, keepdims=True)
    var = jnp.mean((y - mean) ** 2, -1, keepdims=True)
    y = (y - mean) / jnp.sqrt(var + 1e-5) * params["ln_g"] + params["ln_b"]
    return y, Ho, Wo


# ---------------------------------- main --------------------------------------

if __name__ == "__main__":
    # Small but representative shapes: PVT stage-1 style patch embed.
    B, in_chans, H, W = 2, 3, 16, 16
    patch_size, stride = 7, 4
    embed_dim = 128          # lane-dense output (multiple of 128)

    key = jax.random.PRNGKey(0)
    k_param, k_x = jax.random.split(key)
    params = init_overlap_patch_embed_params(k_param, in_chans, embed_dim, patch_size)
    x = jax.random.normal(k_x, (B, in_chans, H, W), jnp.float32)

    fwd = jax.jit(lambda p, xx: overlap_patch_embed(
        p, xx, patch_size=patch_size, stride=stride))
    tokens, Ho, Wo = fwd(params, x)
    tokens = jax.block_until_ready(tokens)
    Ho, Wo = int(Ho), int(Wo)

    ref, Ho_r, Wo_r = overlap_patch_embed_ref(
        params, x, patch_size=patch_size, stride=stride)
    assert (Ho, Wo) == (Ho_r, Wo_r)
    assert tokens.shape == (B, Ho * Wo, embed_dim)
    max_err = float(jnp.max(jnp.abs(tokens - ref)))
    # bf16 inputs with f32 accumulation vs a HIGHEST-precision f32 reference.
    assert jnp.allclose(tokens, ref, rtol=3e-2, atol=3e-2), max_err

    print("KERNEL_OK")
</pallas_src>

<mosaic_0001>
module attributes {stable_mosaic.version = 11 : i64} {
  func.func @_patch_embed_kernel(%arg0: i32, %arg1: memref<16x147xbf16, #tpu.memory_space<vmem>>, %arg2: memref<147x128xbf16, #tpu.memory_space<vmem>>, %arg3: memref<3x128xf32, #tpu.memory_space<vmem>>, %arg4: memref<16x128xf32, #tpu.memory_space<vmem>>) attributes {dimension_semantics = [#tpu.dimension_semantics<parallel>], iteration_bounds = array<i64: 2>, scalar_prefetch = 0 : i64, scratch_operands = 0 : i64, tpu.core_type = #tpu.core_type<tc>, window_params = [{transform_indices = @transform_0, window_bounds = array<i64: 16, 147>}, {pipeline_mode = #tpu.pipeline_mode<synchronous>, transform_indices = @transform_1, window_bounds = array<i64: 147, 128>}, {pipeline_mode = #tpu.pipeline_mode<synchronous>, transform_indices = @transform_2, window_bounds = array<i64: 3, 128>}, {transform_indices = @transform_3, window_bounds = array<i64: 16, 128>}]} {
    %c0 = arith.constant 0 : index
    %c0_0 = arith.constant 0 : index
    %0 = vector.load %arg1[%c0, %c0_0] : memref<16x147xbf16, #tpu.memory_space<vmem>>, vector<16x147xbf16>
    %c0_1 = arith.constant 0 : index
    %c0_2 = arith.constant 0 : index
    %1 = vector.load %arg2[%c0_1, %c0_2] : memref<147x128xbf16, #tpu.memory_space<vmem>>, vector<147x128xbf16>
    %cst = arith.constant dense<0.000000e+00> : vector<16x128xf32>
    %2 = tpu.matmul %0, %1, %cst {dimension_numbers = #tpu.dot_dimension_numbers<[1], [0], [0], [1], [0, 0, 1, 1], [], []>} : vector<16x147xbf16>, vector<147x128xbf16>, vector<16x128xf32> -> vector<16x128xf32>
    %c0_3 = arith.constant 0 : index
    %c0_4 = arith.constant 0 : index
    %3 = vector.load %arg3[%c0_3, %c0_4] : memref<3x128xf32, #tpu.memory_space<vmem>>, vector<3x128xf32>
    %4 = vector.extract_strided_slice %3 {offsets = [0, 0], sizes = [1, 128], strides = [1, 1]} : vector<3x128xf32> to vector<1x128xf32>
    %5 = vector.broadcast %4 : vector<1x128xf32> to vector<16x128xf32>
    %6 = arith.addf %2, %5 : vector<16x128xf32>
    %cst_5 = arith.constant dense<0.000000e+00> : vector<16xf32>
    %7 = vector.multi_reduction <add>, %6, %cst_5 [1] : vector<16x128xf32> to vector<16xf32>
    %8 = vector.shape_cast %7 : vector<16xf32> to vector<16x1xf32>
    %9 = arith.mulf %6, %6 : vector<16x128xf32>
    %cst_6 = arith.constant dense<0.000000e+00> : vector<16xf32>
    %10 = vector.multi_reduction <add>, %9, %cst_6 [1] : vector<16x128xf32> to vector<16xf32>
    %11 = vector.shape_cast %10 : vector<16xf32> to vector<16x1xf32>
    %cst_7 = arith.constant 7.812500e-03 : f32
    %12 = vector.broadcast %cst_7 : f32 to vector<16x1xf32>
    %13 = arith.mulf %8, %12 : vector<16x1xf32>
    %cst_8 = arith.constant 7.812500e-03 : f32
    %14 = vector.broadcast %cst_8 : f32 to vector<16x1xf32>
    %15 = arith.mulf %11, %14 : vector<16x1xf32>
    %16 = arith.mulf %13, %13 : vector<16x1xf32>
    %17 = arith.subf %15, %16 : vector<16x1xf32>
    %18 = vector.broadcast %13 : vector<16x1xf32> to vector<16x128xf32>
    %19 = arith.subf %6, %18 : vector<16x128xf32>
    %cst_9 = arith.constant 9.99999974E-6 : f32
    %20 = vector.broadcast %cst_9 : f32 to vector<16x1xf32>
    %21 = arith.addf %17, %20 : vector<16x1xf32>
    %22 = math.rsqrt %21 : vector<16x1xf32>
    %23 = vector.broadcast %22 : vector<16x1xf32> to vector<16x128xf32>
    %24 = arith.mulf %19, %23 : vector<16x128xf32>
    %25 = vector.extract_strided_slice %3 {offsets = [1, 0], sizes = [1, 128], strides = [1, 1]} : vector<3x128xf32> to vector<1x128xf32>
    %26 = vector.broadcast %25 : vector<1x128xf32> to vector<16x128xf32>
    %27 = arith.mulf %24, %26 : vector<16x128xf32>
    %28 = vector.extract_strided_slice %3 {offsets = [2, 0], sizes = [1, 128], strides = [1, 1]} : vector<3x128xf32> to vector<1x128xf32>
    %29 = vector.broadcast %28 : vector<1x128xf32> to vector<16x128xf32>
    %30 = arith.addf %27, %29 : vector<16x128xf32>
    %c0_10 = arith.constant 0 : index
    %c0_11 = arith.constant 0 : index
    %31 = vector.load %arg4[%c0_10, %c0_11] : memref<16x128xf32, #tpu.memory_space<vmem>>, vector<16x128xf32>
    tpu.vector_store %arg4[%c0_10, %c0_11], %30 {strides = array<i32>} : memref<16x128xf32, #tpu.memory_space<vmem>>, vector<16x128xf32>,
    return
  }
  func.func @transform_0(%arg0: i32) -> (i32, i32) {
    %c0_i32 = arith.constant 0 : i32
    %c0_i32_0 = arith.constant 0 : i32
    return %arg0, %c0_i32 : i32, i32
  }
  func.func @transform_1(%arg0: i32) -> (i32, i32) {
    %c0_i32 = arith.constant 0 : i32
    %c0_i32_0 = arith.constant 0 : i32
    %c0_i32_1 = arith.constant 0 : i32
    return %c0_i32, %c0_i32_0 : i32, i32
  }
  func.func @transform_2(%arg0: i32) -> (i32, i32) {
    %c0_i32 = arith.constant 0 : i32
    %c0_i32_0 = arith.constant 0 : i32
    %c0_i32_1 = arith.constant 0 : i32
    return %c0_i32, %c0_i32_0 : i32, i32
  }
  func.func @transform_3(%arg0: i32) -> (i32, i32) {
    %c0_i32 = arith.constant 0 : i32
    %c0_i32_0 = arith.constant 0 : i32
    return %arg0, %c0_i32 : i32, i32
  }
}

</mosaic_0001>

<llo_original>
// kernel: _lambda_.1
$region0: #{_lambda_.1}
  #allocation0 [shape = 'u32[]', space=smem, size = 0x4, offset = 0x4, fixed_abs, tag = 'smem constant byte address 0x4 - core index']
  #allocation1 [shape = 'u32[72,128]{1,0:T(1,128)}', space=vmem, size = 0x9000, scoped, tag = 'internal scratch']
  %s0 = inlined_call_operand.vmem [shape: bf16[32,147], index: 0, kind: input, shape index: {}]
  %s1 = inlined_call_operand.vmem [shape: bf16[147,128], index: 1, kind: input, shape index: {}]
  %s2 = inlined_call_operand.vmem [shape: f32[3,128], index: 2, kind: input, shape index: {}]
  %s3 = inlined_call_operand.hbm [shape: f32[32,128], index: 3, kind: output, shape index: {}]
  %s4 = sld [smem:[#allocation0]]
  $region45: #{_lambda_.1} parent=0
    _
  %s6 = ssub.s32 1, %s4
  %s7 = scalar_select 0, %s6, %s4
  $region1: #{_lambda_.1} parent=0
    #allocation2 [shape = 'u8[16384]{0}', space=vmem, size = 0x4000, scoped, tag = 'output window, operand 0']
    #allocation3 [shape = 's32[2]{0}', space=sflag, size = 0x8, scoped, tag = 'scoped memory for _lambda_.1']
    %8 = vsyncpa [#allocation3], 0
    %s9 = scalar_lea.sflag [#allocation3], 1
    %10 = vsyncpa %s9, 0
    loop: start=0, step=1, limit=4
    $region2: #{_lambda_.1} parent=1 // loop_pre_header
      _
    $region3: #{_lambda_.1} parent=1 // loop_header
      %s12 = sphi 0, %s16
      %p13 = scmp.ge.s32.totalorder %s12, 4
      %s22 = sphi 0, %s24
      %s25 = sphi 0, %s22
      %s26 = sphi 0, %s25
      %s42 = sphi 0, %s26
      %s46 = sphi 0, %s46
      %s48 = sphi 0, %s46
      %s49 = sphi 0, %s48
      %s63 = sphi 0, %s49
      %s67 = sphi 0, %s67
      %s69 = sphi 0, %s67
      %s70 = sphi 0, %s69
      %s84 = sphi 0, %s70
      %s90 = sphi 0, %s92
      %s93 = sphi 0, %s90
      %s94 = sphi 0, %s93
      %s110 = sphi 0, %s94
    $region4: #{_lambda_.1} parent=1 // loop_header_branch
      %15 = sbr.rel (%p13) target = $region8
    $region5: #{_lambda_.1} parent=1 // loop_body
      %s17 = ssub.s32 %s12, 1
      %s18 = ssub.s32 %s12, 2
      %s19 = sadd.s32 %s12, 1
      %s20 = ssub.s32 %s12, %s19
      %p21 = scmp.eq.s32.totalorder %s20, 0
      %s23 = sadd.s32 %s22, 1
      %s24 = scalar_select %p21, %s22, %s23
      %p27 = pneg %p21
      %p28 = scmp.eq.s32.totalorder %s12, 1
      %p29 = por %p27, %p28
      %p30 = scmp.ne.s32.totalorder %s22, %s25
      %p31 = scmp.eq.s32.totalorder %s12, 0
      %p32 = por %p30, %p31
      %p33 = scmp.ne.s32.totalorder %s22, %s25
      %p34 = scmp.eq.s32.totalorder %s17, 1
      %p35 = por %p33, %p34
      %p36 = scmp.ne.s32.totalorder %s25, %s26
      %p37 = scmp.eq.s32.totalorder %s17, 0
      %p38 = por %p36, %p37
      %p39 = scmp.ne.s32.totalorder %s25, %s26
      %p40 = scmp.eq.s32.totalorder %s18, 1
      %p41 = por %p39, %p40
      %p43 = scmp.ne.s32.totalorder %s26, %s42
      %p44 = scmp.eq.s32.totalorder %s18, 0
      %p45 = por %p43, %p44
      %s47 = sadd.s32 %s46, 1
      %p50 = scmp.eq.s32.totalorder %s12, 1
      %p51 = scmp.ne.s32.totalorder %s46, %s48
      %p52 = scmp.eq.s32.totalorder %s12, 0
      %p53 = por %p51, %p52
      %p54 = scmp.ne.s32.totalorder %s46, %s48
      %p55 = scmp.eq.s32.totalorder %s17, 1
      %p56 = por %p54, %p55
      %p57 = scmp.ne.s32.totalorder %s48, %s49
      %p58 = scmp.eq.s32.totalorder %s17, 0
      %p59 = por %p57, %p58
      %p60 = scmp.ne.s32.totalorder %s48, %s49
      %p61 = scmp.eq.s32.totalorder %s18, 1
      %p62 = por %p60, %p61
      %p64 = scmp.ne.s32.totalorder %s49, %s63
      %p65 = scmp.eq.s32.totalorder %s18, 0
      %p66 = por %p64, %p65
      %s68 = sadd.s32 %s67, 1
      %p71 = scmp.eq.s32.totalorder %s12, 1
      %p72 = scmp.ne.s32.totalorder %s67, %s69
      %p73 = scmp.eq.s32.totalorder %s12, 0
      %p74 = por %p72, %p73
      %p75 = scmp.ne.s32.totalorder %s67, %s69
      %p76 = scmp.eq.s32.totalorder %s17, 1
      %p77 = por %p75, %p76
      %p78 = scmp.ne.s32.totalorder %s69, %s70
      %p79 = scmp.eq.s32.totalorder %s17, 0
      %p80 = por %p78, %p79
      %p81 = scmp.ne.s32.totalorder %s69, %s70
      %p82 = scmp.eq.s32.totalorder %s18, 1
      %p83 = por %p81, %p82
      %p85 = scmp.ne.s32.totalorder %s70, %s84
      %p86 = scmp.eq.s32.totalorder %s18, 0
      %p87 = por %p85, %p86
      %s88 = ssub.s32 %s12, %s19
      %p89 = scmp.eq.s32.totalorder %s88, 0
      %s91 = sadd.s32 %s90, 1
      %s92 = scalar_select %p89, %s90, %s91
      %p95 = pneg %p89
      %p96 = scmp.eq.s32.totalorder %s12, 1
      %p97 = por %p95, %p96
      %p98 = scmp.ne.s32.totalorder %s90, %s93
      %p99 = scmp.eq.s32.totalorder %s12, 0
      %p100 = por %p98, %p99
      %p101 = scmp.ne.s32.totalorder %s90, %s93
      %p102 = scmp.eq.s32.totalorder %s17, 1
      %p103 = por %p101, %p102
      %p104 = scmp.ne.s32.totalorder %s93, %s94
      %p105 = scmp.eq.s32.totalorder %s17, 0
      %p106 = por %p104, %p105
      %p107 = scmp.ne.s32.totalorder %s93, %s94
      %p108 = scmp.eq.s32.totalorder %s18, 1
      %p109 = por %p107, %p108
      %p111 = scmp.ne.s32.totalorder %s94, %s110
      %p112 = scmp.eq.s32.totalorder %s18, 0
      %p113 = por %p111, %p112
      %p114 = scmp.le.s32.totalorder 1, %s12
      %p115 = scmp.lt.s32.totalorder %s12, 3
      %p116 = pnand %p114, %p115
      %p117 = pneg %p116
      // Predicated region
      $region9: #{_lambda_.1} parent=5 // pred_check
        _
      $region10: #{_lambda_.1} parent=5 // pred_check_branch
        %119 = sbr.rel (%p116) target = $region12
      $region11: #{_lambda_.1} parent=5 // pred_region
        %s120 = ssub.s32 %s12, 1
        // Predicated region
        $region13: #{_lambda_.1} parent=11 // pred_check
          %p121 = pneg %p59
        $region14: #{_lambda_.1} parent=11 // pred_check_branch
          %123 = sbr.rel (%p121) target = $region16
        $region15: #{_lambda_.1} parent=11 // pred_region
          _
        $region16: #{_lambda_.1} parent=11 // pred_fallthru
          _
        // Predicated region
        $region17: #{_lambda_.1} parent=11 // pred_check
          %p124 = pneg %p80
        $region18: #{_lambda_.1} parent=11 // pred_check_branch
          %126 = sbr.rel (%p124) target = $region20
        $region19: #{_lambda_.1} parent=11 // pred_region
          _
        $region20: #{_lambda_.1} parent=11 // pred_fallthru
          _
      $region12: #{_lambda_.1} parent=5 // pred_fallthru
        _
      %p127 = scmp.lt.s32.totalorder %s12, 2
      // Predicated region
      $region21: #{_lambda_.1} parent=5 // pred_check
        %p128 = pneg %p127
      $region22: #{_lambda_.1} parent=5 // pred_check_branch
        %130 = sbr.rel (%p128) target = $region24
      $region23: #{_lambda_.1} parent=5 // pred_region
        // Predicated region
        $region25: #{_lambda_.1} parent=23 // pred_check
          %p131 = pneg %p32
        $region26: #{_lambda_.1} parent=23 // pred_check_branch
          %133 = sbr.rel (%p131) target = $region28
        $region27: #{_lambda_.1} parent=23 // pred_region
          %s134 = smul.u32 2, %s12
          %p135 = scmp.lt.s32.totalorder %s134, 3
          %s136 = scalar_select %p135, %s134, 3
          %s137 = smul.addr %s136, 2
          %s138 = smul.addr %s137, 4
          %s139 = scalar_lea.vmem %s0, %s138
          %s140 = smul.u32 2, %s12
        $region28: #{_lambda_.1} parent=23 // pred_fallthru
          _
      $region24: #{_lambda_.1} parent=5 // pred_fallthru
        _
      %p141 = scmp.le.s32.totalorder 1, %s12
      %p142 = scmp.lt.s32.totalorder %s12, 3
      %p143 = pnand %p141, %p142
      %p144 = pneg %p143
      // Predicated region
      $region29: #{_lambda_.1} parent=5 // pred_check
        _
      $region30: #{_lambda_.1} parent=5 // pred_check_branch
        %146 = sbr.rel (%p143) target = $region32
      $region31: #{_lambda_.1} parent=5 // pred_region
        %s147 = ssub.s32 %s12, 1
        %s148 = smul.u32 2, %s17
        %p149 = scmp.lt.s32.totalorder %s148, 3
        %s150 = scalar_select %p149, %s148, 3
        %s151 = smul.addr %s150, 2
        %s152 = smul.addr %s151, 4
        %s153 = scalar_lea.vmem %s0, %s152
        %p154 = pneg %p38
        %p155 = pneg %p35
        %p156 = pneg %p59
        %p157 = pneg %p56
        %p158 = pneg %p80
        %p159 = pneg %p77
        %p160 = pneg %p106
        %p161 = pneg %p103
        %s162 = sand.u32 %s93, 1
        %s163 = scalar_lea.sflag [#allocation3], %s162
        %s164 = sand.u32 %s93, 1
        %s165 = smul.addr %s164, 16
        %s166 = scalar_lea.vmem [#allocation2], %s165
        %s167 = smul.u32 2, %s17
        %p168 = scmp.lt.s32.totalorder %s167, 3
        %s169 = scalar_select %p168, %s167, 3
        %s170 = smul.addr %s169, 2
        %s171 = smul.addr %s170, 4
        %s172 = scalar_lea.vmem %s0, %s171
        %s173 = smul.u32 2, %s17
        %s174 = smul.u32 2, %s17
        %v176 = vld [vmem:[%s172] sm:$0xff]
        %v177 = vld [vmem:[%s172 + $0x8] sm:$0xff]
        %v178 = vld [vmem:[%s1] sm:$0xf]
        %v179 = vld [vmem:[%s1 + $0x4] sm:$0xf]
        %v180 = vld [vmem:[%s1 + $0x8] sm:$0xf]
        %v181 = vld [vmem:[%s1 + $0xc] sm:$0xf]
        %v182 = vld [vmem:[%s1 + $0x10] sm:$0xf]
        %v183 = vld [vmem:[%s1 + $0x14] sm:$0xf]
        %v184 = vld [vmem:[%s1 + $0x18] sm:$0xf]
        %v185 = vld [vmem:[%s1 + $0x1c] sm:$0xf]
        %v186 = vld [vmem:[%s1 + $0x20] sm:$0xf]
        %v187 = vld [vmem:[%s1 + $0x24] sm:$0xf]
        %v188 = vld [vmem:[%s1 + $0x28] sm:$0xf]
        %v189 = vld [vmem:[%s1 + $0x2c] sm:$0xf]
        %v190 = vld [vmem:[%s1 + $0x30] sm:$0xf]
        %v191 = vld [vmem:[%s1 + $0x34] sm:$0xf]
        %v192 = vld [vmem:[%s1 + $0x38] sm:$0xf]
        %v193 = vld [vmem:[%s1 + $0x3c] sm:$0xf]
        %v194 = vld [vmem:[%s1 + $0x40] sm:$0xf]
        %v195 = vld [vmem:[%s1 + $0x44] sm:$0xf]
        %v196 = vld [vmem:[%s1 + $0x48] sm:$0x3]
        %v197 = vld [vmem:[%s2] sm:$0x7]
        %v198 = vperm.slane %v197, 0
        %v201 = vunpack.c.l.b16 %v176
        %v202 = vunpack.c.h.b16 %v176
        %v203 = vunpack.c.l.b16 %v177
        %v204 = vunpack.c.h.b16 %v177
        %v205 = vpack.c.b16 %v203, %v201
        %v206 = vpack.c.b16 %v204, %v202
        %v227 = vunpack.c.l.b16 %v178
        %v228 = vunpack.c.l.b16 %v179
        %v229 = vunpack.c.l.b16 %v180
        %v230 = vunpack.c.l.b16 %v181
        %v231 = vunpack.c.l.b16 %v182
        %v232 = vunpack.c.l.b16 %v183
        %v233 = vunpack.c.l.b16 %v184
        %v234 = vunpack.c.l.b16 %v185
        %v235 = vunpack.c.l.b16 %v186
        %v236 = vunpack.c.l.b16 %v187
        %v237 = vunpack.c.l.b16 %v188
        %v238 = vunpack.c.l.b16 %v189
        %v239 = vunpack.c.l.b16 %v190
        %v240 = vunpack.c.l.b16 %v191
        %v241 = vunpack.c.l.b16 %v192
        %v242 = vunpack.c.l.b16 %v193
        %v243 = vunpack.c.l.b16 %v194
        %v244 = vunpack.c.l.b16 %v195
        %v245 = vunpack.c.l.b16 %v196
        %v246 = vpack.c.b16 %v228, %v227
        %v247 = vpack.c.b16 %v230, %v229
        %v248 = vpack.c.b16 %v232, %v231
        %v249 = vpack.c.b16 %v234, %v233
        %v250 = vpack.c.b16 %v236, %v235
        %v251 = vpack.c.b16 %v238, %v237
        %v252 = vpack.c.b16 %v240, %v239
        %v253 = vpack.c.b16 %v242, %v241
        %v254 = vpack.c.b16 %v244, %v243
        %v255 = vpack.c.b16 %v245, %v245
        %vm265 = vcmask 154624
        %v267 = vsel %vm265, %v206, 0
        %vm269 = vcmask 1040384
        %vm270 = vcmask 1041408
        %v271 = vsel %vm269, 4294967295, 65535
        %v272 = vsel %vm270, %v271, 0
        %v274 = vand.u32 %v255, %v272
        %276 = vmatpush.bf16.msra.mxu0 %v253
        %277 = vmatpush.bf16.msra.mxu0 %v252
        %278 = vmatpush.bf16.msra.mxu0 %v251
        %279 = vmatpush.bf16.msra.mxu0 %v250
        %280 = vmatpush.bf16.msra.mxu0 %v249
        %281 = vmatpush.bf16.msra.mxu0 %v248
        %282 = vmatpush.bf16.msra.mxu0 %v247
        %283 = vmatpush.bf16.msra.mxu0 %v246
        %284 = vmatmul.bf16.gmra.mxu0 %v205
        %v285 = vpop.f32.mrf.mxu0
        %v286 = vadd.f32 %v198, %v285
        %v287 = vpop.f32.mrf.mxu0
        %v288 = vadd.f32 %v198, %v287
        %289 = vdwg.mxu0
        %290 = vmatpush.bf16.msra.mxu0 0
        %291 = vmatpush.bf16.msra.mxu0 0
        %292 = vmatpush.bf16.msra.mxu0 0
        %293 = vmatpush.bf16.msra.mxu0 0
        %294 = vmatpush.bf16.msra.mxu0 0
        %295 = vmatpush.bf16.msra.mxu0 0
        %296 = vmatpush.bf16.msra.mxu0 %v274
        %297 = vmatpush.bf16.msra.mxu0 %v254
        %298 = vmatmul.bf16.gmra.mxu0 %v267
        %v299 = vpop.f32.mrf.mxu0
        %v300 = vadd.f32 %v286, %v299
        %v301 = vpop.f32.mrf.mxu0
        %v302 = vadd.f32 %v288, %v301
        %303 = vdwg.mxu0
        %304 = vadd.xlane.f32.xlu0 %v300
        %v305 = vpop.xlane.xlu0 %304
        %306 = vadd.xlane.f32.xlu0 %v302
        %v307 = vpop.xlane.xlu0 %306
        %v308 = vmul.f32 %v300, %v300
        %v309 = vmul.f32 %v302, %v302
        %310 = vadd.xlane.f32.xlu0 %v308
        %v311 = vpop.xlane.xlu0 %310
        %312 = vadd.xlane.f32.xlu0 %v309
        %v313 = vpop.xlane.xlu0 %312
        %v314 = vmul.f32 %v305, 0.0078125
        %v315 = vmul.f32 %v307, 0.0078125
        %v316 = vmul.f32 %v311, 0.0078125
        %v317 = vmul.f32 %v313, 0.0078125
        %v318 = vmul.f32 %v314, %v314
        %v319 = vmul.f32 %v315, %v315
        %v320 = vsub.f32 %v316, %v318
        %v321 = vsub.f32 %v317, %v319
        %v322 = vsub.f32 %v300, %v314
        %v323 = vsub.f32 %v302, %v315
        %v324 = vadd.f32 %v320, 1e-05
        %v325 = vadd.f32 %v321, 1e-05
        %v326 = vrsqrt.pop %v324
        %v327 = vmul.f32 %v326, %v324
        %v328 = vmul.f32 %v327, %v326
        %v329 = vmul.f32 0.5, %v328
        %v330 = vsub.f32 1.5, %v329
        %v331 = vmul.f32 %v326, %v330
        %vm332 = vweird.f32 %v324
        %vm333 = vweird.f32 %v326
        %vm334 = vmor %vm332, %vm333
        %v335 = vsel %vm334, %v326, %v331
        %v336 = vrsqrt.pop %v325
        %v337 = vmul.f32 %v336, %v325
        %v338 = vmul.f32 %v337, %v336
        %v339 = vmul.f32 0.5, %v338
        %v340 = vsub.f32 1.5, %v339
        %v341 = vmul.f32 %v336, %v340
        %vm342 = vweird.f32 %v325
        %vm343 = vweird.f32 %v336
        %vm344 = vmor %vm342, %vm343
        %v345 = vsel %vm344, %v336, %v341
        %v346 = vmul.f32 %v322, %v335
        %v347 = vmul.f32 %v323, %v345
        %v348 = vperm.slane %v197, 1
        %v349 = vmul.f32 %v346, %v348
        %v350 = vmul.f32 %v347, %v348
        %v351 = vperm.slane %v197, 2
        %v352 = vadd.f32 %v349, %v351
        %v353 = vadd.f32 %v350, %v351
        %354 = vst [vmem:[%s166] sm:$0xff] %v352
        %355 = vst [vmem:[%s166 + $0x8] sm:$0xff] %v353
        %s356 = sand.u32 %s93, 1
        %s357 = scalar_lea.sflag [#allocation3], %s356
        %s358 = sand.u32 %s93, 1
        %s359 = smul.addr %s358, 16
        %s360 = scalar_lea.vmem [#allocation2], %s359
        // Predicated region
        $region33: #{_lambda_.1} parent=31 // pred_check
          %p361 = pneg %p103
        $region34: #{_lambda_.1} parent=31 // pred_check_branch
          %363 = sbr.rel (%p361) target = $region36
        $region35: #{_lambda_.1} parent=31 // pred_region
          %s364 = smul.u32 2, %s17
          %366 = vsyncadd %s357, 0
          %s367 = smul.addr %s364, 8
          %s368 = scalar_lea.hbm %s3, %s367
          %s369 = sshll.u32 %s360, 4
          %s370 = int_to_ptr.vmem [resolvable:$true] %s369
          %s371 = sshll.u32 %s368, 4
          %s372 = int_to_ptr.hbm [resolvable:$true] %s371
          %377 = dma.vmem_to_hbm [thread:$0]  %s370, 256, %s372, %s357, 128, 128, 8
        $region36: #{_lambda_.1} parent=31 // pred_fallthru
          _
      $region32: #{_lambda_.1} parent=5 // pred_fallthru
        _
      %p378 = scmp.le.s32.totalorder 2, %s12
      // Predicated region
      $region37: #{_lambda_.1} parent=5 // pred_check
        %p379 = pneg %p378
      $region38: #{_lambda_.1} parent=5 // pred_check_branch
        %381 = sbr.rel (%p379) target = $region40
      $region39: #{_lambda_.1} parent=5 // pred_region
        %s382 = ssub.s32 %s12, 2
        // Predicated region
        $region41: #{_lambda_.1} parent=39 // pred_check
          %p383 = pneg %p109
        $region42: #{_lambda_.1} parent=39 // pred_check_branch
          %385 = sbr.rel (%p383) target = $region44
        $region43: #{_lambda_.1} parent=39 // pred_region
          %s386 = sand.u32 %s94, 1
          %s387 = scalar_lea.sflag [#allocation3], %s386
          %s388 = sand.u32 %s94, 1
          %s389 = smul.addr %s388, 16
          %s390 = scalar_lea.vmem [#allocation2], %s389
          %392 = dma.done %s387, 256
        $region44: #{_lambda_.1} parent=39 // pred_fallthru
          _
      $region40: #{_lambda_.1} parent=5 // pred_fallthru
        _
    $region6: #{_lambda_.1} parent=1 // loop_footer
      %s16 = sadd.s32 1, %s12
    $region7: #{_lambda_.1} parent=1 // loop_footer_branch
      %11 = sbr.rel target = $region3
    $region8: #{_lambda_.1} parent=1 // loop_exit
      _
    %393 = vsyncpa [#allocation3], 1
    %s394 = scalar_lea.sflag [#allocation3], 1
    %395 = vsyncpa %s394, 1

</llo_original>
